<compile_context>
chip_gen: v7x
topology: tpu7x:2x2x1
jax: 0.10.0
libtpu: 0.0.40
codegen_flags: <defaults>
</compile_context>

<pallas_src>
import functools

import jax
import jax.numpy as jnp
from jax.experimental import pallas as pl
from jax.experimental.pallas import tpu as pltpu

_LANE = 128
_SUBLANE = 8
_BLOCK_ROWS = 2048  # 2048 x 128 f32 = 1 MiB block; ~85% of HBM roofline per tile sweeps.

# int32 constants (values >= 2^31 written as (u32 value) - 2^32 so they fit int32).
_GOLDEN = 0x9E3779B9 - (1 << 32)
_M1 = 0x7FEB352D
_M2 = 0x846CA68B - (1 << 32)


def _mix32(x):
    """lowbias32 integer hash on int32 (logical right-shifts emulated with masks)."""
    x = x ^ ((x >> 16) & 0xFFFF)
    x = x * _M1                      # wraps mod 2^32
    x = x ^ ((x >> 15) & 0x1FFFF)
    x = x * _M2
    x = x ^ ((x >> 16) & 0xFFFF)
    return x


def _erfinv_f32(x):
    """Single-precision erfinv (Giles 2010 polynomial); valid for |x| < 1."""
    w = -jnp.log((1.0 - x) * (1.0 + x))
    w_small = w < 5.0
    w1 = w - 2.5
    w2 = jnp.sqrt(w) - 3.0
    p1 = jnp.float32(2.81022636e-08)
    for c in (3.43273939e-07, -3.5233877e-06, -4.39150654e-06, 2.1858087e-04,
              -1.25372503e-03, -4.17768164e-03, 2.46640727e-01, 1.50140941e+00):
        p1 = p1 * w1 + jnp.float32(c)
    p2 = jnp.float32(-2.00214257e-04)
    for c in (1.00950558e-04, 1.34934322e-03, -3.67342844e-03, 5.73950773e-03,
              -7.6224613e-03, 9.43887047e-03, 1.00167406e+00, 2.83297682e+00):
        p2 = p2 * w2 + jnp.float32(c)
    return jnp.where(w_small, p1, p2) * x


def _noise_kernel(seed_ref, x_ref, o_ref, *, wt):
    tr, lane = x_ref.shape
    pid = pl.program_id(0)

    # Per-element global index = counter for the stateless PRNG (unique across tiles/cores).
    row = jax.lax.broadcasted_iota(jnp.int32, (tr, lane), 0)
    col = jax.lax.broadcasted_iota(jnp.int32, (tr, lane), 1)
    gidx = (pid * tr + row) * lane + col

    # Hash (seed, index) -> 32 random bits (two mixing rounds for avalanche).
    seed_key = _mix32(seed_ref[0] + jnp.int32(_GOLDEN))
    bits = _mix32(_mix32(gidx ^ seed_key))

    # 24 random bits -> uniform in (-1, 1), endpoints excluded:  u = (b + 0.5)/2^23 - 1.
    b = ((bits >> 8) & 0xFFFFFF).astype(jnp.float32)
    u = b * jnp.float32(2.0 ** -23) + jnp.float32(2.0 ** -24 - 1.0)

    # Standard normal: z = sqrt(2) * erfinv(u).
    noise = jnp.float32(1.4142135623730951) * _erfinv_f32(u)

    o_ref[...] = (x_ref[...].astype(jnp.float32)
                  + jnp.float32(wt) * noise).astype(o_ref.dtype)


def noise_forward(x, seed, wt=0.01, block_rows=_BLOCK_ROWS):
    """x + wt * N(0,1) noise, generated inside a Pallas TPU kernel."""
    orig_shape = x.shape
    orig_dtype = x.dtype
    n = x.size

    # Flatten to a lane-dense (rows, 128) slab; pad only when not already aligned.
    tile = _LANE * _SUBLANE
    padded = pl.cdiv(n, tile) * tile
    xf = jnp.reshape(x, (n,))
    if padded != n:
        xf = jnp.pad(xf, (0, padded - n))
    rows = padded // _LANE
    x2 = jnp.reshape(xf, (rows, _LANE))

    tr = min(block_rows, rows)          # multiple of 8 by construction
    grid = (pl.cdiv(rows, tr),)

    seed_arr = jnp.asarray([seed], dtype=jnp.int32)
    itemsize = jnp.dtype(orig_dtype).itemsize

    out2 = pl.pallas_call(
        functools.partial(_noise_kernel, wt=float(wt)),
        out_shape=jax.ShapeDtypeStruct((rows, _LANE), orig_dtype),
        grid_spec=pltpu.PrefetchScalarGridSpec(
            num_scalar_prefetch=1,
            grid=grid,
            in_specs=[pl.BlockSpec((tr, _LANE), lambda i, seed: (i, 0))],
            out_specs=pl.BlockSpec((tr, _LANE), lambda i, seed: (i, 0)),
        ),
        compiler_params=pltpu.CompilerParams(
            dimension_semantics=("parallel",),   # independent tiles; shards across v7x's 2 TCs
        ),
        cost_estimate=pl.CostEstimate(
            flops=40 * padded,              # hash + erfinv polynomial + FMA, rough
            transcendentals=2 * padded,     # log + sqrt per element
            bytes_accessed=2 * padded * itemsize,
        ),
    )(seed_arr, x2)

    if padded != n:
        return jnp.reshape(jnp.reshape(out2, (-1,))[:n], orig_shape)
    return jnp.reshape(out2, orig_shape)


if __name__ == "__main__":
    key = jax.random.PRNGKey(0)
    # NCHW input, matching the PyTorch module's typical usage.
    x = jax.random.normal(key, (2, 4, 16, 16), dtype=jnp.float32)

    wt = 0.01
    y = noise_forward(x, seed=0, wt=wt)
    y = jax.block_until_ready(y)

    # Sanity checks: shape/dtype preserved; perturbation ~ wt * N(0, 1).
    assert y.shape == x.shape and y.dtype == x.dtype
    z = (y - x) / wt                       # should look like standard normal draws
    assert bool(jnp.all(jnp.isfinite(z)))
    assert float(jnp.max(jnp.abs(z))) < 6.0          # 24-bit erfinv path caps |z| ~ 5.4
    std = float(jnp.std(z))
    mean = float(jnp.mean(z))
    assert 0.8 < std < 1.25, std
    assert abs(mean) < 0.2, mean

    print("KERNEL_OK")
</pallas_src>

<mosaic_0001>
module attributes {stable_mosaic.version = 11 : i64} {
  func.func @_noise_kernel(%arg0: i32, %arg1: memref<1xi32, #tpu.memory_space<smem>>, %arg2: memref<16x128xf32, #tpu.memory_space<vmem>>, %arg3: memref<16x128xf32, #tpu.memory_space<vmem>>) attributes {dimension_semantics = [#tpu.dimension_semantics<parallel>], iteration_bounds = array<i64: 1>, scalar_prefetch = 1 : i64, scratch_operands = 0 : i64, tpu.core_type = #tpu.core_type<tc>, window_params = [{transform_indices = @transform_0, window_bounds = array<i64: 16, 128>}, {transform_indices = @transform_1, window_bounds = array<i64: 16, 128>}]} {
    %0 = tpu.iota {dimensions = array<i32: 0>} : vector<16x128xi32>
    %1 = tpu.iota {dimensions = array<i32: 1>} : vector<16x128xi32>
    %c16_i32 = arith.constant 16 : i32
    %2 = arith.muli %arg0, %c16_i32 : i32
    %3 = vector.broadcast %2 : i32 to vector<16x128xi32>
    %4 = arith.addi %3, %0 : vector<16x128xi32>
    %c128_i32 = arith.constant 128 : i32
    %5 = vector.broadcast %c128_i32 : i32 to vector<16x128xi32>
    %6 = arith.muli %4, %5 : vector<16x128xi32>
    %7 = arith.addi %6, %1 : vector<16x128xi32>
    %c0 = arith.constant 0 : index
    %8 = memref.load %arg1[%c0] : memref<1xi32, #tpu.memory_space<smem>>
    %c-1640531527_i32 = arith.constant -1640531527 : i32
    %9 = arith.addi %8, %c-1640531527_i32 : i32
    %c16_i32_0 = arith.constant 16 : i32
    %10 = arith.shrsi %9, %c16_i32_0 : i32
    %c65535_i32 = arith.constant 65535 : i32
    %11 = arith.andi %10, %c65535_i32 : i32
    %12 = arith.xori %9, %11 : i32
    %c2146121005_i32 = arith.constant 2146121005 : i32
    %13 = arith.muli %12, %c2146121005_i32 : i32
    %c15_i32 = arith.constant 15 : i32
    %14 = arith.shrsi %13, %c15_i32 : i32
    %c131071_i32 = arith.constant 131071 : i32
    %15 = arith.andi %14, %c131071_i32 : i32
    %16 = arith.xori %13, %15 : i32
    %c-2073254261_i32 = arith.constant -2073254261 : i32
    %17 = arith.muli %16, %c-2073254261_i32 : i32
    %c16_i32_1 = arith.constant 16 : i32
    %18 = arith.shrsi %17, %c16_i32_1 : i32
    %c65535_i32_2 = arith.constant 65535 : i32
    %19 = arith.andi %18, %c65535_i32_2 : i32
    %20 = arith.xori %17, %19 : i32
    %21 = vector.broadcast %20 : i32 to vector<16x128xi32>
    %22 = arith.xori %7, %21 : vector<16x128xi32>
    %c16_i32_3 = arith.constant 16 : i32
    %23 = vector.broadcast %c16_i32_3 : i32 to vector<16x128xi32>
    %24 = arith.shrsi %22, %23 : vector<16x128xi32>
    %c65535_i32_4 = arith.constant 65535 : i32
    %25 = vector.broadcast %c65535_i32_4 : i32 to vector<16x128xi32>
    %26 = arith.andi %24, %25 : vector<16x128xi32>
    %27 = arith.xori %22, %26 : vector<16x128xi32>
    %c2146121005_i32_5 = arith.constant 2146121005 : i32
    %28 = vector.broadcast %c2146121005_i32_5 : i32 to vector<16x128xi32>
    %29 = arith.muli %27, %28 : vector<16x128xi32>
    %c15_i32_6 = arith.constant 15 : i32
    %30 = vector.broadcast %c15_i32_6 : i32 to vector<16x128xi32>
    %31 = arith.shrsi %29, %30 : vector<16x128xi32>
    %c131071_i32_7 = arith.constant 131071 : i32
    %32 = vector.broadcast %c131071_i32_7 : i32 to vector<16x128xi32>
    %33 = arith.andi %31, %32 : vector<16x128xi32>
    %34 = arith.xori %29, %33 : vector<16x128xi32>
    %c-2073254261_i32_8 = arith.constant -2073254261 : i32
    %35 = vector.broadcast %c-2073254261_i32_8 : i32 to vector<16x128xi32>
    %36 = arith.muli %34, %35 : vector<16x128xi32>
    %c16_i32_9 = arith.constant 16 : i32
    %37 = vector.broadcast %c16_i32_9 : i32 to vector<16x128xi32>
    %38 = arith.shrsi %36, %37 : vector<16x128xi32>
    %c65535_i32_10 = arith.constant 65535 : i32
    %39 = vector.broadcast %c65535_i32_10 : i32 to vector<16x128xi32>
    %40 = arith.andi %38, %39 : vector<16x128xi32>
    %41 = arith.xori %36, %40 : vector<16x128xi32>
    %c16_i32_11 = arith.constant 16 : i32
    %42 = vector.broadcast %c16_i32_11 : i32 to vector<16x128xi32>
    %43 = arith.shrsi %41, %42 : vector<16x128xi32>
    %c65535_i32_12 = arith.constant 65535 : i32
    %44 = vector.broadcast %c65535_i32_12 : i32 to vector<16x128xi32>
    %45 = arith.andi %43, %44 : vector<16x128xi32>
    %46 = arith.xori %41, %45 : vector<16x128xi32>
    %c2146121005_i32_13 = arith.constant 2146121005 : i32
    %47 = vector.broadcast %c2146121005_i32_13 : i32 to vector<16x128xi32>
    %48 = arith.muli %46, %47 : vector<16x128xi32>
    %c15_i32_14 = arith.constant 15 : i32
    %49 = vector.broadcast %c15_i32_14 : i32 to vector<16x128xi32>
    %50 = arith.shrsi %48, %49 : vector<16x128xi32>
    %c131071_i32_15 = arith.constant 131071 : i32
    %51 = vector.broadcast %c131071_i32_15 : i32 to vector<16x128xi32>
    %52 = arith.andi %50, %51 : vector<16x128xi32>
    %53 = arith.xori %48, %52 : vector<16x128xi32>
    %c-2073254261_i32_16 = arith.constant -2073254261 : i32
    %54 = vector.broadcast %c-2073254261_i32_16 : i32 to vector<16x128xi32>
    %55 = arith.muli %53, %54 : vector<16x128xi32>
    %c16_i32_17 = arith.constant 16 : i32
    %56 = vector.broadcast %c16_i32_17 : i32 to vector<16x128xi32>
    %57 = arith.shrsi %55, %56 : vector<16x128xi32>
    %c65535_i32_18 = arith.constant 65535 : i32
    %58 = vector.broadcast %c65535_i32_18 : i32 to vector<16x128xi32>
    %59 = arith.andi %57, %58 : vector<16x128xi32>
    %60 = arith.xori %55, %59 : vector<16x128xi32>
    %c8_i32 = arith.constant 8 : i32
    %61 = vector.broadcast %c8_i32 : i32 to vector<16x128xi32>
    %62 = arith.shrsi %60, %61 : vector<16x128xi32>
    %c16777215_i32 = arith.constant 16777215 : i32
    %63 = vector.broadcast %c16777215_i32 : i32 to vector<16x128xi32>
    %64 = arith.andi %62, %63 : vector<16x128xi32>
    %65 = arith.sitofp %64 : vector<16x128xi32> to vector<16x128xf32>
    %cst = arith.constant 1.1920929E-7 : f32
    %66 = vector.broadcast %cst : f32 to vector<16x128xf32>
    %67 = arith.mulf %65, %66 : vector<16x128xf32>
    %cst_19 = arith.constant -0.99999994 : f32
    %68 = vector.broadcast %cst_19 : f32 to vector<16x128xf32>
    %69 = arith.addf %67, %68 : vector<16x128xf32>
    %cst_20 = arith.constant 1.000000e+00 : f32
    %70 = vector.broadcast %cst_20 : f32 to vector<16x128xf32>
    %71 = arith.subf %70, %69 : vector<16x128xf32>
    %cst_21 = arith.constant 1.000000e+00 : f32
    %72 = vector.broadcast %cst_21 : f32 to vector<16x128xf32>
    %73 = arith.addf %72, %69 : vector<16x128xf32>
    %74 = arith.mulf %71, %73 : vector<16x128xf32>
    %75 = math.log %74 : vector<16x128xf32>
    %cst_22 = arith.constant 0.000000e+00 : f32
    %76 = vector.broadcast %cst_22 : f32 to vector<16x128xf32>
    %77 = arith.subf %76, %75 : vector<16x128xf32>
    %cst_23 = arith.constant 5.000000e+00 : f32
    %78 = vector.broadcast %cst_23 : f32 to vector<16x128xf32>
    %79 = arith.cmpf olt, %77, %78 : vector<16x128xf32>
    %cst_24 = arith.constant 2.500000e+00 : f32
    %80 = vector.broadcast %cst_24 : f32 to vector<16x128xf32>
    %81 = arith.subf %77, %80 : vector<16x128xf32>
    %82 = math.sqrt %77 : vector<16x128xf32>
    %cst_25 = arith.constant 3.000000e+00 : f32
    %83 = vector.broadcast %cst_25 : f32 to vector<16x128xf32>
    %84 = arith.subf %82, %83 : vector<16x128xf32>
    %cst_26 = arith.constant 2.81022636E-8 : f32
    %85 = vector.broadcast %cst_26 : f32 to vector<16x128xf32>
    %86 = arith.mulf %85, %81 : vector<16x128xf32>
    %cst_27 = arith.constant 3.43273939E-7 : f32
    %87 = vector.broadcast %cst_27 : f32 to vector<16x128xf32>
    %88 = arith.addf %86, %87 : vector<16x128xf32>
    %89 = arith.mulf %88, %81 : vector<16x128xf32>
    %cst_28 = arith.constant -3.5233877E-6 : f32
    %90 = vector.broadcast %cst_28 : f32 to vector<16x128xf32>
    %91 = arith.addf %89, %90 : vector<16x128xf32>
    %92 = arith.mulf %91, %81 : vector<16x128xf32>
    %cst_29 = arith.constant -4.39150654E-6 : f32
    %93 = vector.broadcast %cst_29 : f32 to vector<16x128xf32>
    %94 = arith.addf %92, %93 : vector<16x128xf32>
    %95 = arith.mulf %94, %81 : vector<16x128xf32>
    %cst_30 = arith.constant 2.1858087E-4 : f32
    %96 = vector.broadcast %cst_30 : f32 to vector<16x128xf32>
    %97 = arith.addf %95, %96 : vector<16x128xf32>
    %98 = arith.mulf %97, %81 : vector<16x128xf32>
    %cst_31 = arith.constant -0.00125372503 : f32
    %99 = vector.broadcast %cst_31 : f32 to vector<16x128xf32>
    %100 = arith.addf %98, %99 : vector<16x128xf32>
    %101 = arith.mulf %100, %81 : vector<16x128xf32>
    %cst_32 = arith.constant -0.00417768164 : f32
    %102 = vector.broadcast %cst_32 : f32 to vector<16x128xf32>
    %103 = arith.addf %101, %102 : vector<16x128xf32>
    %104 = arith.mulf %103, %81 : vector<16x128xf32>
    %cst_33 = arith.constant 0.246640727 : f32
    %105 = vector.broadcast %cst_33 : f32 to vector<16x128xf32>
    %106 = arith.addf %104, %105 : vector<16x128xf32>
    %107 = arith.mulf %106, %81 : vector<16x128xf32>
    %cst_34 = arith.constant 1.50140941 : f32
    %108 = vector.broadcast %cst_34 : f32 to vector<16x128xf32>
    %109 = arith.addf %107, %108 : vector<16x128xf32>
    %cst_35 = arith.constant -2.00214257E-4 : f32
    %110 = vector.broadcast %cst_35 : f32 to vector<16x128xf32>
    %111 = arith.mulf %110, %84 : vector<16x128xf32>
    %cst_36 = arith.constant 1.00950558E-4 : f32
    %112 = vector.broadcast %cst_36 : f32 to vector<16x128xf32>
    %113 = arith.addf %111, %112 : vector<16x128xf32>
    %114 = arith.mulf %113, %84 : vector<16x128xf32>
    %cst_37 = arith.constant 0.00134934322 : f32
    %115 = vector.broadcast %cst_37 : f32 to vector<16x128xf32>
    %116 = arith.addf %114, %115 : vector<16x128xf32>
    %117 = arith.mulf %116, %84 : vector<16x128xf32>
    %cst_38 = arith.constant -0.00367342844 : f32
    %118 = vector.broadcast %cst_38 : f32 to vector<16x128xf32>
    %119 = arith.addf %117, %118 : vector<16x128xf32>
    %120 = arith.mulf %119, %84 : vector<16x128xf32>
    %cst_39 = arith.constant 0.00573950773 : f32
    %121 = vector.broadcast %cst_39 : f32 to vector<16x128xf32>
    %122 = arith.addf %120, %121 : vector<16x128xf32>
    %123 = arith.mulf %122, %84 : vector<16x128xf32>
    %cst_40 = arith.constant -0.0076224613 : f32
    %124 = vector.broadcast %cst_40 : f32 to vector<16x128xf32>
    %125 = arith.addf %123, %124 : vector<16x128xf32>
    %126 = arith.mulf %125, %84 : vector<16x128xf32>
    %cst_41 = arith.constant 0.00943887047 : f32
    %127 = vector.broadcast %cst_41 : f32 to vector<16x128xf32>
    %128 = arith.addf %126, %127 : vector<16x128xf32>
    %129 = arith.mulf %128, %84 : vector<16x128xf32>
    %cst_42 = arith.constant 1.00167406 : f32
    %130 = vector.broadcast %cst_42 : f32 to vector<16x128xf32>
    %131 = arith.addf %129, %130 : vector<16x128xf32>
    %132 = arith.mulf %131, %84 : vector<16x128xf32>
    %cst_43 = arith.constant 2.83297682 : f32
    %133 = vector.broadcast %cst_43 : f32 to vector<16x128xf32>
    %134 = arith.addf %132, %133 : vector<16x128xf32>
    %135 = arith.select %79, %109, %134 : vector<16x128xi1>, vector<16x128xf32>
    %136 = arith.mulf %135, %69 : vector<16x128xf32>
    %cst_44 = arith.constant 1.41421354 : f32
    %137 = vector.broadcast %cst_44 : f32 to vector<16x128xf32>
    %138 = arith.mulf %137, %136 : vector<16x128xf32>
    %c0_45 = arith.constant 0 : index
    %c0_46 = arith.constant 0 : index
    %139 = vector.load %arg2[%c0_45, %c0_46] : memref<16x128xf32, #tpu.memory_space<vmem>>, vector<16x128xf32>
    %cst_47 = arith.constant 0.00999999977 : f32
    %140 = vector.broadcast %cst_47 : f32 to vector<16x128xf32>
    %141 = arith.mulf %140, %138 : vector<16x128xf32>
    %142 = arith.addf %139, %141 : vector<16x128xf32>
    %c0_48 = arith.constant 0 : index
    %c0_49 = arith.constant 0 : index
    %143 = vector.load %arg3[%c0_48, %c0_49] : memref<16x128xf32, #tpu.memory_space<vmem>>, vector<16x128xf32>
    tpu.vector_store %arg3[%c0_48, %c0_49], %142 {strides = array<i32>} : memref<16x128xf32, #tpu.memory_space<vmem>>, vector<16x128xf32>,
    return
  }
  func.func @transform_0(%arg0: i32, %arg1: memref<1xi32, #tpu.memory_space<smem>>) -> (i32, i32) {
    %c0_i32 = arith.constant 0 : i32
    %c0_i32_0 = arith.constant 0 : i32
    return %arg0, %c0_i32 : i32, i32
  }
  func.func @transform_1(%arg0: i32, %arg1: memref<1xi32, #tpu.memory_space<smem>>) -> (i32, i32) {
    %c0_i32 = arith.constant 0 : i32
    %c0_i32_0 = arith.constant 0 : i32
    return %arg0, %c0_i32 : i32, i32
  }
}

</mosaic_0001>

<llo_original>
// kernel: tpu_custom_call.1
$region0: #{tpu_custom_call.1}
  #allocation0 [shape = 'u32[]', space=smem, size = 0x4, offset = 0x4, fixed_abs, tag = 'smem constant byte address 0x4 - core index']
  #allocation1 [shape = 'u32[144,128]{1,0:T(1,128)}', space=vmem, size = 0x12000, scoped, tag = 'internal scratch']
  #allocation2 [shape = 's32[1]{0}', space=sflag, size = 0x4, scoped, tag = 'scoped memory for tpu_custom_call.1']
  #allocation3 [shape = 's32[1]{0:T(128)S(6)}', space=smem, size = 0x200, scoped, tag = 'prefetched SMEM operand 0']
  %s0 = inlined_call_operand.<no memory space> [shape: s32[1], index: 0, kind: input, shape index: {}]
  %s1 = inlined_call_operand.hbm [shape: f32[16,128], index: 1, kind: input, shape index: {}]
  %s2 = inlined_call_operand.hbm [shape: f32[16,128], index: 2, kind: output, shape index: {}]
  %s3 = sld [smem:[#allocation0]]
  $region18: #{tpu_custom_call.1} parent=0
    _
  %s5 = ssub.s32 1, %s3
  %s6 = scalar_select 0, %s5, %s3
  %7 = sst [smem:[#allocation3]] %s0
  $region1: #{tpu_custom_call.1} parent=0
    #allocation4 [shape = 'u8[8192]{0}', space=vmem, size = 0x2000, scoped, tag = 'input window, operand 1, single buffered']
    #allocation5 [shape = 's32[1]{0}', space=sflag, size = 0x4, scoped, tag = 'scoped memory for tpu_custom_call.1']
    #allocation6 [shape = 's32[1]{0}', space=sflag, size = 0x4, scoped, tag = 'scoped memory for tpu_custom_call.1']
    #allocation7 [shape = 'u8[8192]{0}', space=vmem, size = 0x2000, scoped, tag = 'output window, operand 0, single buffered']
    %8 = vsyncpa [#allocation5], 0
    %9 = vsyncpa [#allocation6], 0
    // Predicated region
    $region2: #{tpu_custom_call.1} parent=1 // pred_check
      _
    $region3: #{tpu_custom_call.1} parent=1 // pred_check_branch
      %11 = sbr.rel (0) target = $region5
    $region4: #{tpu_custom_call.1} parent=1 // pred_region
      %s13 = ssub.s32 256, 256
      %14 = vsyncadd [#allocation5], %s13
      %s15 = sshll.u32 [#allocation4], 4
      %s16 = int_to_ptr.vmem [resolvable:$true] %s15
      %21 = dma.hbm_to_vmem [thread:$0]  %s1, 256, %s16, [#allocation5], 128, 128, 8
    $region5: #{tpu_custom_call.1} parent=1 // pred_fallthru
      _
    // Predicated region
    $region6: #{tpu_custom_call.1} parent=1 // pred_check
      _
    $region7: #{tpu_custom_call.1} parent=1 // pred_check_branch
      %23 = sbr.rel (0) target = $region9
    $region8: #{tpu_custom_call.1} parent=1 // pred_region
      %24 = dma.done [#allocation5], 256
    $region9: #{tpu_custom_call.1} parent=1 // pred_fallthru
      _
    %v25 = vlaneseq
    %v26 = vshrl.u32 %v25, 7
    %v27 = vadd.s32 %v26, 8
    %v28 = vlaneseq
    %v29 = vand.u32 %v28, 127
    %s30 = smul.u32 0, 16
    %v31 = vstv %s30
    %v32 = vadd.s32 %v31, %v26
    %v33 = vadd.s32 %v31, %v27
    %v34 = vmul.u32 %v32, 128
    %v35 = vmul.u32 %v33, 128
    %v36 = vadd.s32 %v34, %v29
    %v37 = vadd.s32 %v35, %v29
    %s38 = sld [smem:[#allocation3]]
    %s39 = sadd.s32 %s38, 2654435769
    %s40 = sshra.s32 %s39, 16
    %s41 = sand.u32 %s40, 65535
    %s42 = sxor.u32 %s39, %s41
    %s43 = smul.u32 %s42, 2146121005
    %s44 = sshra.s32 %s43, 15
    %s45 = sand.u32 %s44, 131071
    %s46 = sxor.u32 %s43, %s45
    %s47 = smul.u32 %s46, 2221713035
    %s48 = sshra.s32 %s47, 16
    %s49 = sand.u32 %s48, 65535
    %s50 = sxor.u32 %s47, %s49
    %v51 = vstv %s50
    %v52 = vxor.u32 %v36, %v51
    %v53 = vxor.u32 %v37, %v51
    %v54 = vshra.s32 %v52, 16
    %v55 = vshra.s32 %v53, 16
    %v56 = vand.u32 %v54, 65535
    %v57 = vand.u32 %v55, 65535
    %v58 = vxor.u32 %v52, %v56
    %v59 = vxor.u32 %v53, %v57
    %v60 = vmul.u32 %v58, 2146121005
    %v61 = vmul.u32 %v59, 2146121005
    %v62 = vshra.s32 %v60, 15
    %v63 = vshra.s32 %v61, 15
    %v64 = vand.u32 %v62, 131071
    %v65 = vand.u32 %v63, 131071
    %v66 = vxor.u32 %v60, %v64
    %v67 = vxor.u32 %v61, %v65
    %v68 = vmul.u32 %v66, 2221713035
    %v69 = vmul.u32 %v67, 2221713035
    %v70 = vshra.s32 %v68, 16
    %v71 = vshra.s32 %v69, 16
    %v72 = vand.u32 %v70, 65535
    %v73 = vand.u32 %v71, 65535
    %v74 = vxor.u32 %v68, %v72
    %v75 = vxor.u32 %v69, %v73
    %v76 = vshra.s32 %v74, 16
    %v77 = vshra.s32 %v75, 16
    %v78 = vand.u32 %v76, 65535
    %v79 = vand.u32 %v77, 65535
    %v80 = vxor.u32 %v74, %v78
    %v81 = vxor.u32 %v75, %v79
    %v82 = vmul.u32 %v80, 2146121005
    %v83 = vmul.u32 %v81, 2146121005
    %v84 = vshra.s32 %v82, 15
    %v85 = vshra.s32 %v83, 15
    %v86 = vand.u32 %v84, 131071
    %v87 = vand.u32 %v85, 131071
    %v88 = vxor.u32 %v82, %v86
    %v89 = vxor.u32 %v83, %v87
    %v90 = vmul.u32 %v88, 2221713035
    %v91 = vmul.u32 %v89, 2221713035
    %v92 = vshra.s32 %v90, 16
    %v93 = vshra.s32 %v91, 16
    %v94 = vand.u32 %v92, 65535
    %v95 = vand.u32 %v93, 65535
    %v96 = vxor.u32 %v90, %v94
    %v97 = vxor.u32 %v91, %v95
    %v98 = vshra.s32 %v96, 8
    %v99 = vshra.s32 %v97, 8
    %v100 = vand.u32 %v98, 16777215
    %v101 = vand.u32 %v99, 16777215
    %v102 = vcvt.s32.f32 %v100
    %v103 = vcvt.s32.f32 %v101
    %v104 = vmul.f32 %v102, 1.1920929e-07
    %v105 = vmul.f32 %v103, 1.1920929e-07
    %v106 = vadd.f32 %v104, -0.99999994
    %v107 = vadd.f32 %v105, -0.99999994
    %v108 = vsub.f32 1.0, %v106
    %v109 = vsub.f32 1.0, %v107
    %v110 = vadd.f32 %v106, 1.0
    %v111 = vadd.f32 %v107, 1.0
    %v112 = vmul.f32 %v108, %v110
    %v113 = vmul.f32 %v109, %v111
    %v114 = vlog2.pop %v112
    %v115 = vmul.f32 %v114, 0.6931472
    %v116 = vlog2.pop %v113
    %v117 = vmul.f32 %v116, 0.6931472
    %v118 = vsub.f32 0.0, %v115
    %v119 = vsub.f32 0.0, %v117
    %vm120 = vcmp.lt.f32.partialorder %v118, 5.0
    %vm121 = vcmp.lt.f32.partialorder %v119, 5.0
    %v122 = vsub.f32 %v118, 2.5
    %v123 = vsub.f32 %v119, 2.5
    %v124 = vrsqrt.pop %v118
    %v125 = vmul.f32 %v118, %v124
    %vm126 = vcmp.eq.f32.partialorder %v118, inf
    %v127 = vsel %vm126, %v118, %v125
    %vm128 = vcmp.eq.f32.partialorder %v118, 0.0
    %v129 = vand.u32 %v118, 2147483648
    %v130 = vsel %vm128, %v129, %v127
    %v131 = vrsqrt.pop %v119
    %v132 = vmul.f32 %v119, %v131
    %vm133 = vcmp.eq.f32.partialorder %v119, inf
    %v134 = vsel %vm133, %v119, %v132
    %vm135 = vcmp.eq.f32.partialorder %v119, 0.0
    %v136 = vand.u32 %v119, 2147483648
    %v137 = vsel %vm135, %v136, %v134
    %v138 = vsub.f32 %v130, 3.0
    %v139 = vsub.f32 %v137, 3.0
    %v140 = vmul.f32 %v122, 2.8102264e-08
    %v141 = vmul.f32 %v123, 2.8102264e-08
    %v142 = vadd.f32 %v140, 3.4327394e-07
    %v143 = vadd.f32 %v141, 3.4327394e-07
    %v144 = vmul.f32 %v142, %v122
    %v145 = vmul.f32 %v143, %v123
    %v146 = vadd.f32 %v144, -3.5233877e-06
    %v147 = vadd.f32 %v145, -3.5233877e-06
    %v148 = vmul.f32 %v146, %v122
    %v149 = vmul.f32 %v147, %v123
    %v150 = vadd.f32 %v148, -4.3915065e-06
    %v151 = vadd.f32 %v149, -4.3915065e-06
    %v152 = vmul.f32 %v150, %v122
    %v153 = vmul.f32 %v151, %v123
    %v154 = vadd.f32 %v152, 0.00021858087
    %v155 = vadd.f32 %v153, 0.00021858087
    %v156 = vmul.f32 %v154, %v122
    %v157 = vmul.f32 %v155, %v123
    %v158 = vadd.f32 %v156, -0.001253725
    %v159 = vadd.f32 %v157, -0.001253725
    %v160 = vmul.f32 %v158, %v122
    %v161 = vmul.f32 %v159, %v123
    %v162 = vadd.f32 %v160, -0.0041776816
    %v163 = vadd.f32 %v161, -0.0041776816
    %v164 = vmul.f32 %v162, %v122
    %v165 = vmul.f32 %v163, %v123
    %v166 = vadd.f32 %v164, 0.24664073
    %v167 = vadd.f32 %v165, 0.24664073
    %v168 = vmul.f32 %v166, %v122
    %v169 = vmul.f32 %v167, %v123
    %v170 = vadd.f32 %v168, 1.5014094
    %v171 = vadd.f32 %v169, 1.5014094
    %v172 = vmul.f32 %v138, -0.00020021426
    %v173 = vmul.f32 %v139, -0.00020021426
    %v174 = vadd.f32 %v172, 0.00010095056
    %v175 = vadd.f32 %v173, 0.00010095056
    %v176 = vmul.f32 %v174, %v138
    %v177 = vmul.f32 %v175, %v139
    %v178 = vadd.f32 %v176, 0.0013493432
    %v179 = vadd.f32 %v177, 0.0013493432
    %v180 = vmul.f32 %v178, %v138
    %v181 = vmul.f32 %v179, %v139
    %v182 = vadd.f32 %v180, -0.0036734284
    %v183 = vadd.f32 %v181, -0.0036734284
    %v184 = vmul.f32 %v182, %v138
    %v185 = vmul.f32 %v183, %v139
    %v186 = vadd.f32 %v184, 0.0057395077
    %v187 = vadd.f32 %v185, 0.0057395077
    %v188 = vmul.f32 %v186, %v138
    %v189 = vmul.f32 %v187, %v139
    %v190 = vadd.f32 %v188, -0.0076224613
    %v191 = vadd.f32 %v189, -0.0076224613
    %v192 = vmul.f32 %v190, %v138
    %v193 = vmul.f32 %v191, %v139
    %v194 = vadd.f32 %v192, 0.0094388705
    %v195 = vadd.f32 %v193, 0.0094388705
    %v196 = vmul.f32 %v194, %v138
    %v197 = vmul.f32 %v195, %v139
    %v198 = vadd.f32 %v196, 1.001674
    %v199 = vadd.f32 %v197, 1.001674
    %v200 = vmul.f32 %v198, %v138
    %v201 = vmul.f32 %v199, %v139
    %v202 = vadd.f32 %v200, 2.8329768
    %v203 = vadd.f32 %v201, 2.8329768
    %v204 = vsel %vm120, %v170, %v202
    %v205 = vsel %vm121, %v171, %v203
    %v206 = vmul.f32 %v204, %v106
    %v207 = vmul.f32 %v205, %v107
    %v208 = vmul.f32 %v206, 1.4142135
    %v209 = vmul.f32 %v207, 1.4142135
    %v210 = vld [vmem:[#allocation4] sm:$0xff]
    %v211 = vld [vmem:[#allocation4 + $0x8] sm:$0xff]
    %v212 = vmul.f32 %v208, 0.01
    %v213 = vmul.f32 %v209, 0.01
    %v214 = vadd.f32 %v210, %v212
    %v215 = vadd.f32 %v211, %v213
    %216 = vst [vmem:[#allocation7] sm:$0xff] %v214
    %217 = vst [vmem:[#allocation7 + $0x8] sm:$0xff] %v215
    // Predicated region
    $region10: #{tpu_custom_call.1} parent=1 // pred_check
      _
    $region11: #{tpu_custom_call.1} parent=1 // pred_check_branch
      %219 = sbr.rel (0) target = $region13
    $region12: #{tpu_custom_call.1} parent=1 // pred_region
      %s221 = ssub.s32 256, 256
      %222 = vsyncadd [#allocation6], %s221
      %s223 = sshll.u32 [#allocation7], 4
      %s224 = int_to_ptr.vmem [resolvable:$true] %s223
      %229 = dma.vmem_to_hbm [thread:$0]  %s224, 256, %s2, [#allocation6], 128, 128, 8
    $region13: #{tpu_custom_call.1} parent=1 // pred_fallthru
      _
    // Predicated region
    $region14: #{tpu_custom_call.1} parent=1 // pred_check
      _
    $region15: #{tpu_custom_call.1} parent=1 // pred_check_branch
      %231 = sbr.rel (0) target = $region17
    $region16: #{tpu_custom_call.1} parent=1 // pred_region
      %232 = dma.done [#allocation6], 256
    $region17: #{tpu_custom_call.1} parent=1 // pred_fallthru
      _
    %233 = vsyncpa [#allocation5], 1
    %234 = vsyncpa [#allocation6], 1

</llo_original>
